<compile_context>
chip_gen: v7x
topology: tpu7x:2x2x1
jax: 0.10.0
libtpu: 0.0.40
codegen_flags: <defaults>
</compile_context>

<pallas_src>
import functools

import jax
import jax.numpy as jnp
from jax.experimental import pallas as pl
from jax.experimental.pallas import tpu as pltpu


_TILE_CANDIDATES = (2048, 1024, 512, 256, 128)


def _round_up(x, m):
    return -(-x // m) * m


@functools.lru_cache(maxsize=1)
def _tpu_hw():
    """(vmem_capacity_bytes, tensorcores_per_chip) with conservative fallbacks."""
    vmem = 64 * 1024 * 1024  # conservative fallback (v7x per-TC size)
    cores = 1
    try:
        info = pltpu.get_tpu_info()
        cap = getattr(info, "vmem_capacity_bytes", None)
        if cap:
            vmem = int(cap)
    except Exception:
        pass
    try:
        kind = jax.devices()[0].device_kind.lower()
        if "v7" in kind or "7x" in kind:
            cores = 2  # dual TensorCore per chip
    except Exception:
        pass
    return vmem, cores


def _l2_normalize_rows(acc, out_dtype):
    # F.normalize(h, dim=-1, p=2): h / max(||h||_2, 1e-12)
    #   == h * rsqrt(max(sum(h^2), 1e-24))   (rsqrt -> EUP slot, divide -> VPU mul)
    sumsq = jnp.sum(acc * acc, axis=-1, keepdims=True)
    inv = jax.lax.rsqrt(jnp.maximum(sumsq, 1e-24))
    return (acc * inv).astype(out_dtype)


def _gcn_kernel_single(adj_ref, h_ref, o_ref):
    """Fast path: whole contraction in one grid step; h fully VMEM-resident."""
    acc = jnp.dot(adj_ref[...], h_ref[...], preferred_element_type=jnp.float32)
    o_ref[...] = _l2_normalize_rows(acc, o_ref.dtype)


def _gcn_kernel_acc(adj_ref, h_ref, o_ref, acc_ref, *, tk, h_resident):
    """General path: k (adj columns / node dim of h) is the reduction axis.

    NOTE: correctness relies on k being the LAST grid axis (the output block
    index is constant across k, so Pallas writes the tile back once at
    k == last).  Keep the grid order (i, k).
    """
    k = pl.program_id(1)

    @pl.when(k == 0)
    def _():
        acc_ref[...] = jnp.zeros_like(acc_ref)

    if h_resident:
        off = pl.multiple_of(k * tk, tk)
        h_blk = h_ref[pl.ds(off, tk), :]     # slice the VMEM-resident h
    else:
        h_blk = h_ref[...]                    # streamed (tk, d_pad) block

    acc_ref[...] += jnp.dot(adj_ref[...], h_blk,
                            preferred_element_type=jnp.float32)

    @pl.when(k == pl.num_programs(1) - 1)
    def _():
        o_ref[...] = _l2_normalize_rows(acc_ref[...], o_ref.dtype)


def _choose_tm(n128, feasible, num_cores):
    """feasible is sorted descending.  On dual-TC chips prefer a row-tile count
    that splits evenly across cores; on single-TC chips take the largest."""
    if num_cores >= 2:
        for tm in feasible:
            nt = _round_up(n128, tm) // tm
            if nt >= num_cores and nt % num_cores == 0:
                return tm
    return feasible[0]


def _plan(n128, d_pad, elem_bytes, vmem_budget, num_cores, force_acc=False):
    """Pick (path, tm, tk, n_pad, h_resident, need) under the VMEM budget."""
    tmp_row = 3 * 4 * d_pad  # f32 dot result + normalize temporaries per row

    def pad_ok(t):
        # Bound the zero-padding overhead of rounding N up to a multiple of t.
        return t == 128 or (_round_up(n128, t) - n128) * 20 <= n128

    def single_need(tm):
        n_pad = _round_up(n128, tm)
        return (2 * tm * n_pad * elem_bytes      # adj row-slab, double-buffered
                + n_pad * d_pad * elem_bytes     # full h, resident (one copy)
                + 2 * tm * d_pad * elem_bytes    # out block, double-buffered
                + tm * tmp_row)                  # f32 intermediates

    def acc_need(tm, tk, h_resident):
        n_pad = _round_up(n128, max(tm, tk))
        need = (2 * tm * tk * elem_bytes         # adj tile, double-buffered
                + 2 * tm * d_pad * elem_bytes    # out block, double-buffered
                + tm * d_pad * 4                 # f32 accumulator scratch
                + tm * tmp_row                   # f32 intermediates
                + tk * d_pad * elem_bytes)       # h tile / dynamic-slice copy
        if h_resident:
            need += n_pad * d_pad * elem_bytes   # full h resident
        else:
            need += 2 * tk * d_pad * elem_bytes  # h stream, double-buffered
        return need

    # ---- single-step fast path: whole contraction resident, no accumulator ----
    if not force_acc:
        feas = [t for t in _TILE_CANDIDATES
                if pad_ok(t) and single_need(t) <= vmem_budget]
        if feas:
            tm = _choose_tm(n128, feas, num_cores)
            n_pad = _round_up(n128, tm)
            return dict(path="single", tm=tm, tk=n_pad, n_pad=n_pad,
                        h_resident=True, need=single_need(tm))

    # ---- accumulator path (k = reduction axis, kept last in the grid) ----
    for h_resident in (True, False):
        tms = [t for t in _TILE_CANDIDATES
               if pad_ok(t) and acc_need(t, 128, h_resident) <= vmem_budget]
        if not tms:
            continue
        tm = _choose_tm(n128, tms, num_cores)
        tks = [t for t in _TILE_CANDIDATES
               if pad_ok(t) and acc_need(tm, t, h_resident) <= vmem_budget]
        tk = tks[0] if tks else 128
        n_pad = _round_up(n128, max(tm, tk))
        return dict(path="acc", tm=tm, tk=tk, n_pad=n_pad,
                    h_resident=h_resident, need=acc_need(tm, tk, h_resident))

    # Last resort (pathologically small budget): minimal streamed tiles.
    return dict(path="acc", tm=128, tk=128, n_pad=n128,
                h_resident=False, need=acc_need(128, 128, False))


def _gcn_layer(adj_c, h_c, plan, vmem_cap):
    """One propagation layer on already-padded, compute-dtype inputs."""
    n_pad, d_pad = h_c.shape
    tm, tk = plan["tm"], plan["tk"]
    ebytes = jnp.dtype(h_c.dtype).itemsize

    cost = pl.CostEstimate(
        flops=2 * n_pad * n_pad * d_pad,
        transcendentals=n_pad,                        # one rsqrt per row
        bytes_accessed=(n_pad * n_pad * ebytes        # adj stream (dominant)
                        + 2 * n_pad * d_pad * ebytes),  # h in + out
    )

    if plan["path"] == "single":
        grid = (n_pad // tm,)
        in_specs = [
            pl.BlockSpec((tm, n_pad), lambda i: (i, 0)),         # adj row-slab
            pl.BlockSpec(memory_space=pltpu.MemorySpace.VMEM),   # full h, resident once
        ]
        out_specs = pl.BlockSpec((tm, d_pad), lambda i: (i, 0))
        scratch = []
        kernel = _gcn_kernel_single
        dims = ("parallel",)
    else:
        grid = (n_pad // tm, n_pad // tk)
        if plan["h_resident"]:
            # Full h copied into VMEM once -> no per-row-tile HBM re-stream.
            h_spec = pl.BlockSpec(memory_space=pltpu.MemorySpace.VMEM)
        else:
            h_spec = pl.BlockSpec((tk, d_pad), lambda i, k: (k, 0))
        in_specs = [pl.BlockSpec((tm, tk), lambda i, k: (i, k)), h_spec]
        out_specs = pl.BlockSpec((tm, d_pad), lambda i, k: (i, 0))
        scratch = [pltpu.VMEM((tm, d_pad), jnp.float32)]
        kernel = functools.partial(_gcn_kernel_acc, tk=tk,
                                   h_resident=plan["h_resident"])
        dims = ("parallel", "arbitrary")   # k is a reduction: never parallel

    vmem_limit = int(min(int(0.85 * vmem_cap),
                         max(32 * 1024 * 1024, 2 * plan["need"])))

    return pl.pallas_call(
        kernel,
        out_shape=jax.ShapeDtypeStruct((n_pad, d_pad), h_c.dtype),
        grid_spec=pltpu.PrefetchScalarGridSpec(
            num_scalar_prefetch=0,
            grid=grid,
            in_specs=in_specs,
            out_specs=out_specs,
            scratch_shapes=scratch,
        ),
        compiler_params=pltpu.CompilerParams(
            dimension_semantics=dims,
            vmem_limit_bytes=vmem_limit,
        ),
        cost_estimate=cost,
    )(adj_c, h_c)


@functools.partial(jax.jit,
                   static_argnames=("layers", "compute_dtype",
                                    "vmem_budget_bytes", "force_acc_path"))
def global_item_conv(x, adj, *, layers=1, compute_dtype=None,
                     vmem_budget_bytes=None, force_acc_path=False):
    """Pallas equivalent of GlobalItemConv(layers, feat_drop=0).forward (eval).

    compute_dtype:
      None (default) -> exact f32 for layers<=2 (a wrapper-side bf16 cast of adj
      would ADD an N^2 HBM pass rather than save one), bf16 for layers>=3 where
      the one-time adj cast amortizes over the repeated N^2 stream.
      Pass jnp.float32 / jnp.bfloat16 to override explicitly.
    """
    N, D = x.shape
    assert adj.shape == (N, N)
    out_dtype = x.dtype

    if compute_dtype is None:
        compute_dtype = jnp.float32 if layers <= 2 else jnp.bfloat16
    compute_dtype = jnp.dtype(compute_dtype)

    vmem_cap, num_cores = _tpu_hw()
    budget = (int(vmem_budget_bytes) if vmem_budget_bytes is not None
              else int(vmem_cap * 0.6))

    d_pad = _round_up(D, 128)   # exactly the next multiple of 128 (lane-dense)
    n128 = _round_up(N, 128)
    plan = _plan(n128, d_pad, compute_dtype.itemsize, budget, num_cores,
                 force_acc=force_acc_path)
    n_pad = plan["n_pad"]

    # Pad to lane/tile-dense shapes (zero rows/cols change neither the matmul
    # nor the row L2 norm); the cast fuses with the pad into one XLA pass.
    adj_c = adj if n_pad == N else jnp.pad(adj, ((0, n_pad - N), (0, n_pad - N)))
    adj_c = adj_c.astype(compute_dtype)
    h = x if (n_pad == N and d_pad == D) else jnp.pad(
        x, ((0, n_pad - N), (0, d_pad - D)))
    h = h.astype(compute_dtype)

    running = h.astype(jnp.float32) if layers > 1 else None
    for _ in range(layers):
        # feat_drop = 0.0 -> dropout is the identity in eval mode.
        h = _gcn_layer(adj_c, h, plan, vmem_cap)
        if layers > 1:
            running = running + h.astype(jnp.float32)   # running f32 sum

    out = (running / (layers + 1)) if layers > 1 else h
    return out[:N, :D].astype(out_dtype)


def _reference(x, adj, layers=1):
    """Pure-JAX (f32) reference mirroring the PyTorch forward in eval mode."""
    h = x
    final = [x]
    for _ in range(layers):
        h = adj @ h
        norm = jnp.sqrt(jnp.sum(h * h, axis=-1, keepdims=True))
        h = h / jnp.maximum(norm, 1e-12)
        final.append(h)
    if layers > 1:
        h = jnp.sum(jnp.stack(final), axis=0) / (layers + 1)
    return h


if __name__ == "__main__":
    # Small synthetic problem: N=256 nodes, D=32 features.
    N, D = 256, 32
    key = jax.random.PRNGKey(0)
    kx, ka = jax.random.split(key)
    x = jax.random.normal(kx, (N, D), dtype=jnp.float32)
    # Deterministic "adjacency": non-negative, row-normalized weighted graph.
    a_raw = jax.nn.relu(jax.random.normal(ka, (N, N), dtype=jnp.float32))
    adj = a_raw / jnp.maximum(jnp.sum(a_raw, axis=-1, keepdims=True), 1e-12)

    ref1 = _reference(x, adj, layers=1)

    # Default path: layers<=2 runs in exact f32 (single-step fast path).
    out1 = jax.block_until_ready(global_item_conv(x, adj, layers=1))
    assert out1.shape == (N, D), out1.shape
    assert jnp.allclose(out1, ref1, atol=1e-4, rtol=1e-4), float(
        jnp.max(jnp.abs(out1 - ref1)))

    # Explicit bandwidth-optimized bf16 override (single-step path, bf16 stream).
    out1_bf = jax.block_until_ready(
        global_item_conv(x, adj, layers=1, compute_dtype=jnp.bfloat16))
    assert jnp.allclose(out1_bf, ref1, atol=3e-2, rtol=3e-2), float(
        jnp.max(jnp.abs(out1_bf - ref1)))

    # Multi-layer averaging (running f32 sum), still exact f32 at layers=2.
    ref2 = _reference(x, adj, layers=2)
    out2 = jax.block_until_ready(global_item_conv(x, adj, layers=2))
    assert out2.shape == (N, D), out2.shape
    assert jnp.allclose(out2, ref2, atol=1e-4, rtol=1e-4), float(
        jnp.max(jnp.abs(out2 - ref2)))

    # Accumulator path with h VMEM-resident, forced via a small budget override.
    N2 = 512
    kx2, ka2 = jax.random.split(jax.random.PRNGKey(0))
    x2 = jax.random.normal(kx2, (N2, D), dtype=jnp.float32)
    a2 = jax.nn.relu(jax.random.normal(ka2, (N2, N2), dtype=jnp.float32))
    adj2 = a2 / jnp.maximum(jnp.sum(a2, axis=-1, keepdims=True), 1e-12)
    ref3 = _reference(x2, adj2, layers=1)
    out3 = jax.block_until_ready(
        global_item_conv(x2, adj2, layers=1, force_acc_path=True,
                         vmem_budget_bytes=2 * 1024 * 1024))
    assert out3.shape == (N2, D), out3.shape
    assert jnp.allclose(out3, ref3, atol=1e-4, rtol=1e-4), float(
        jnp.max(jnp.abs(out3 - ref3)))

    # Accumulator path with streamed h (very tight budget fallback).
    out4 = jax.block_until_ready(
        global_item_conv(x2, adj2, layers=1, force_acc_path=True,
                         vmem_budget_bytes=768 * 1024))
    assert jnp.allclose(out4, ref3, atol=1e-4, rtol=1e-4), float(
        jnp.max(jnp.abs(out4 - ref3)))

    print("KERNEL_OK")
</pallas_src>

<mosaic_0001>
module attributes {stable_mosaic.version = 11 : i64} {
  func.func @_gcn_kernel_single(%arg0: i32, %arg1: memref<256x256xf32, #tpu.memory_space<vmem>>, %arg2: memref<256x128xf32, #tpu.memory_space<vmem>>, %arg3: memref<256x128xf32, #tpu.memory_space<vmem>>) attributes {dimension_semantics = [#tpu.dimension_semantics<parallel>], iteration_bounds = array<i64: 1>, scalar_prefetch = 0 : i64, scratch_operands = 0 : i64, tpu.core_type = #tpu.core_type<tc>, window_params = [{transform_indices = @transform_0, window_bounds = array<i64: 256, 256>}, {pipeline_mode = #tpu.pipeline_mode<synchronous>, transform_indices = @transform_1, window_bounds = array<i64: 256, 128>}, {transform_indices = @transform_2, window_bounds = array<i64: 256, 128>}]} {
    %c0 = arith.constant 0 : index
    %c0_0 = arith.constant 0 : index
    %0 = vector.load %arg1[%c0, %c0_0] : memref<256x256xf32, #tpu.memory_space<vmem>>, vector<256x256xf32>
    %c0_1 = arith.constant 0 : index
    %c0_2 = arith.constant 0 : index
    %1 = vector.load %arg2[%c0_1, %c0_2] : memref<256x128xf32, #tpu.memory_space<vmem>>, vector<256x128xf32>
    %cst = arith.constant dense<0.000000e+00> : vector<256x128xf32>
    %2 = tpu.matmul %0, %1, %cst {dimension_numbers = #tpu.dot_dimension_numbers<[1], [0], [0], [1], [0, 0, 1, 1], [], []>} : vector<256x256xf32>, vector<256x128xf32>, vector<256x128xf32> -> vector<256x128xf32>
    %3 = arith.mulf %2, %2 : vector<256x128xf32>
    %cst_3 = arith.constant dense<0.000000e+00> : vector<256xf32>
    %4 = vector.multi_reduction <add>, %3, %cst_3 [1] : vector<256x128xf32> to vector<256xf32>
    %5 = vector.shape_cast %4 : vector<256xf32> to vector<256x1xf32>
    %cst_4 = arith.constant 1.000000e-24 : f32
    %6 = vector.broadcast %cst_4 : f32 to vector<256x1xf32>
    %7 = arith.maximumf %5, %6 : vector<256x1xf32>
    %8 = math.rsqrt %7 : vector<256x1xf32>
    %9 = vector.broadcast %8 : vector<256x1xf32> to vector<256x128xf32>
    %10 = arith.mulf %2, %9 : vector<256x128xf32>
    %c0_5 = arith.constant 0 : index
    %c0_6 = arith.constant 0 : index
    %11 = vector.load %arg3[%c0_5, %c0_6] : memref<256x128xf32, #tpu.memory_space<vmem>>, vector<256x128xf32>
    tpu.vector_store %arg3[%c0_5, %c0_6], %10 {strides = array<i32>} : memref<256x128xf32, #tpu.memory_space<vmem>>, vector<256x128xf32>,
    return
  }
  func.func @transform_0(%arg0: i32) -> (i32, i32) {
    %c0_i32 = arith.constant 0 : i32
    %c0_i32_0 = arith.constant 0 : i32
    return %arg0, %c0_i32 : i32, i32
  }
  func.func @transform_1(%arg0: i32) -> (i32, i32) {
    %c0_i32 = arith.constant 0 : i32
    %c0_i32_0 = arith.constant 0 : i32
    %c0_i32_1 = arith.constant 0 : i32
    return %c0_i32, %c0_i32_0 : i32, i32
  }
  func.func @transform_2(%arg0: i32) -> (i32, i32) {
    %c0_i32 = arith.constant 0 : i32
    %c0_i32_0 = arith.constant 0 : i32
    return %arg0, %c0_i32 : i32, i32
  }
}

</mosaic_0001>

<llo_original>
// kernel: global_item_conv.1
$region0: #{global_item_conv.1}
  #allocation0 [shape = 'u32[]', space=smem, size = 0x4, offset = 0x4, fixed_abs, tag = 'smem constant byte address 0x4 - core index']
  #allocation1 [shape = 'u32[144,128]{1,0:T(1,128)}', space=vmem, size = 0x12000, scoped, tag = 'internal scratch']
  %s0 = inlined_call_operand.vmem [shape: f32[256,256], index: 0, kind: input, shape index: {}]
  %s1 = inlined_call_operand.vmem [shape: f32[256,128], index: 1, kind: input, shape index: {}]
  %s2 = inlined_call_operand.vmem [shape: f32[256,128], index: 2, kind: output, shape index: {}]
  %s3 = sld [smem:[#allocation0]]
  $region18: #{global_item_conv.1} parent=0
    _
  %s5 = ssub.s32 1, %s3
  %s6 = scalar_select 0, %s5, %s3
  // Predicated region
  $region2: #{global_item_conv.1} parent=0 // pred_check
    _
  $region3: #{global_item_conv.1} parent=0 // pred_check_branch
    %8 = sbr.rel (0) target = $region5
  $region4: #{global_item_conv.1} parent=0 // pred_region
    _
  $region5: #{global_item_conv.1} parent=0 // pred_fallthru
    _
  // Predicated region
  $region6: #{global_item_conv.1} parent=0 // pred_check
    _
  $region7: #{global_item_conv.1} parent=0 // pred_check_branch
    %10 = sbr.rel (0) target = $region9
  $region8: #{global_item_conv.1} parent=0 // pred_region
    _
  $region9: #{global_item_conv.1} parent=0 // pred_fallthru
    _
  %v11 = vld [vmem:[%s0] sm:$0xff]
  %v12 = vld [vmem:[%s0 + $0x8] sm:$0xff]
  %v13 = vld [vmem:[%s0 + $0x10] sm:$0xff]
  %v14 = vld [vmem:[%s0 + $0x18] sm:$0xff]
  %v15 = vld [vmem:[%s0 + $0x20] sm:$0xff]
  %v16 = vld [vmem:[%s0 + $0x28] sm:$0xff]
  %v17 = vld [vmem:[%s0 + $0x30] sm:$0xff]
  %v18 = vld [vmem:[%s0 + $0x38] sm:$0xff]
  %v19 = vld [vmem:[%s0 + $0x40] sm:$0xff]
  %v20 = vld [vmem:[%s0 + $0x48] sm:$0xff]
  %v21 = vld [vmem:[%s0 + $0x50] sm:$0xff]
  %v22 = vld [vmem:[%s0 + $0x58] sm:$0xff]
  %v23 = vld [vmem:[%s0 + $0x60] sm:$0xff]
  %v24 = vld [vmem:[%s0 + $0x68] sm:$0xff]
  %v25 = vld [vmem:[%s0 + $0x70] sm:$0xff]
  %v26 = vld [vmem:[%s0 + $0x78] sm:$0xff]
  %v27 = vld [vmem:[%s0 + $0x80] sm:$0xff]
  %v28 = vld [vmem:[%s0 + $0x88] sm:$0xff]
  %v29 = vld [vmem:[%s0 + $0x90] sm:$0xff]
  %v30 = vld [vmem:[%s0 + $0x98] sm:$0xff]
  %v31 = vld [vmem:[%s0 + $0xa0] sm:$0xff]
  %v32 = vld [vmem:[%s0 + $0xa8] sm:$0xff]
  %v33 = vld [vmem:[%s0 + $0xb0] sm:$0xff]
  %v34 = vld [vmem:[%s0 + $0xb8] sm:$0xff]
  %v35 = vld [vmem:[%s0 + $0xc0] sm:$0xff]
  %v36 = vld [vmem:[%s0 + $0xc8] sm:$0xff]
  %v37 = vld [vmem:[%s0 + $0xd0] sm:$0xff]
  %v38 = vld [vmem:[%s0 + $0xd8] sm:$0xff]
  %v39 = vld [vmem:[%s0 + $0xe0] sm:$0xff]
  %v40 = vld [vmem:[%s0 + $0xe8] sm:$0xff]
  %v41 = vld [vmem:[%s0 + $0xf0] sm:$0xff]
  %v42 = vld [vmem:[%s0 + $0xf8] sm:$0xff]
  %v43 = vld [vmem:[%s0 + $0x100] sm:$0xff]
  %v44 = vld [vmem:[%s0 + $0x108] sm:$0xff]
  %v45 = vld [vmem:[%s0 + $0x110] sm:$0xff]
  %v46 = vld [vmem:[%s0 + $0x118] sm:$0xff]
  %v47 = vld [vmem:[%s0 + $0x120] sm:$0xff]
  %v48 = vld [vmem:[%s0 + $0x128] sm:$0xff]
  %v49 = vld [vmem:[%s0 + $0x130] sm:$0xff]
  %v50 = vld [vmem:[%s0 + $0x138] sm:$0xff]
  %v51 = vld [vmem:[%s0 + $0x140] sm:$0xff]
  %v52 = vld [vmem:[%s0 + $0x148] sm:$0xff]
  %v53 = vld [vmem:[%s0 + $0x150] sm:$0xff]
  %v54 = vld [vmem:[%s0 + $0x158] sm:$0xff]
  %v55 = vld [vmem:[%s0 + $0x160] sm:$0xff]
  %v56 = vld [vmem:[%s0 + $0x168] sm:$0xff]
  %v57 = vld [vmem:[%s0 + $0x170] sm:$0xff]
  %v58 = vld [vmem:[%s0 + $0x178] sm:$0xff]
  %v59 = vld [vmem:[%s0 + $0x180] sm:$0xff]
  %v60 = vld [vmem:[%s0 + $0x188] sm:$0xff]
  %v61 = vld [vmem:[%s0 + $0x190] sm:$0xff]
  %v62 = vld [vmem:[%s0 + $0x198] sm:$0xff]
  %v63 = vld [vmem:[%s0 + $0x1a0] sm:$0xff]
  %v64 = vld [vmem:[%s0 + $0x1a8] sm:$0xff]
  %v65 = vld [vmem:[%s0 + $0x1b0] sm:$0xff]
  %v66 = vld [vmem:[%s0 + $0x1b8] sm:$0xff]
  %v67 = vld [vmem:[%s0 + $0x1c0] sm:$0xff]
  %v68 = vld [vmem:[%s0 + $0x1c8] sm:$0xff]
  %v69 = vld [vmem:[%s0 + $0x1d0] sm:$0xff]
  %v70 = vld [vmem:[%s0 + $0x1d8] sm:$0xff]
  %v71 = vld [vmem:[%s0 + $0x1e0] sm:$0xff]
  %v72 = vld [vmem:[%s0 + $0x1e8] sm:$0xff]
  %v73 = vld [vmem:[%s0 + $0x1f0] sm:$0xff]
  %v74 = vld [vmem:[%s0 + $0x1f8] sm:$0xff]
  %v75 = vld [vmem:[%s1] sm:$0xff]
  %v76 = vld [vmem:[%s1 + $0x8] sm:$0xff]
  %v77 = vld [vmem:[%s1 + $0x10] sm:$0xff]
  %v78 = vld [vmem:[%s1 + $0x18] sm:$0xff]
  %v79 = vld [vmem:[%s1 + $0x20] sm:$0xff]
  %v80 = vld [vmem:[%s1 + $0x28] sm:$0xff]
  %v81 = vld [vmem:[%s1 + $0x30] sm:$0xff]
  %v82 = vld [vmem:[%s1 + $0x38] sm:$0xff]
  %v83 = vld [vmem:[%s1 + $0x40] sm:$0xff]
  %v84 = vld [vmem:[%s1 + $0x48] sm:$0xff]
  %v85 = vld [vmem:[%s1 + $0x50] sm:$0xff]
  %v86 = vld [vmem:[%s1 + $0x58] sm:$0xff]
  %v87 = vld [vmem:[%s1 + $0x60] sm:$0xff]
  %v88 = vld [vmem:[%s1 + $0x68] sm:$0xff]
  %v89 = vld [vmem:[%s1 + $0x70] sm:$0xff]
  %v90 = vld [vmem:[%s1 + $0x78] sm:$0xff]
  %v91 = vld [vmem:[%s1 + $0x80] sm:$0xff]
  %v92 = vld [vmem:[%s1 + $0x88] sm:$0xff]
  %v93 = vld [vmem:[%s1 + $0x90] sm:$0xff]
  %v94 = vld [vmem:[%s1 + $0x98] sm:$0xff]
  %v95 = vld [vmem:[%s1 + $0xa0] sm:$0xff]
  %v96 = vld [vmem:[%s1 + $0xa8] sm:$0xff]
  %v97 = vld [vmem:[%s1 + $0xb0] sm:$0xff]
  %v98 = vld [vmem:[%s1 + $0xb8] sm:$0xff]
  %v99 = vld [vmem:[%s1 + $0xc0] sm:$0xff]
  %v100 = vld [vmem:[%s1 + $0xc8] sm:$0xff]
  %v101 = vld [vmem:[%s1 + $0xd0] sm:$0xff]
  %v102 = vld [vmem:[%s1 + $0xd8] sm:$0xff]
  %v103 = vld [vmem:[%s1 + $0xe0] sm:$0xff]
  %v104 = vld [vmem:[%s1 + $0xe8] sm:$0xff]
  %v105 = vld [vmem:[%s1 + $0xf0] sm:$0xff]
  %v106 = vld [vmem:[%s1 + $0xf8] sm:$0xff]
  %107 = vmatprep.subr.mxu0 0.0
  %108 = vmatpush1.msra.mxu0 %v75
  %109 = vmatprep.subr.mxu0 0.0
  %110 = vmatpush1.msra.mxu0 %v76
  %111 = vmatprep.subr.mxu0 0.0
  %112 = vmatpush1.msra.mxu0 %v77
  %113 = vmatprep.subr.mxu0 0.0
  %114 = vmatpush1.msra.mxu0 %v78
  %115 = vmatprep.subr.mxu0 0.0
  %116 = vmatpush1.msra.mxu0 %v79
  %117 = vmatprep.subr.mxu0 0.0
  %118 = vmatpush1.msra.mxu0 %v80
  %119 = vmatprep.subr.mxu0 0.0
  %120 = vmatpush1.msra.mxu0 %v81
  %121 = vmatprep.subr.mxu0 0.0
  %122 = vmatpush1.msra.mxu0 %v82
  %123 = vmatprep.subr.mxu0 0.0
  %124 = vmatpush1.msra.mxu0 %v83
  %125 = vmatprep.subr.mxu0 0.0
  %126 = vmatpush1.msra.mxu0 %v84
  %127 = vmatprep.subr.mxu0 0.0
  %128 = vmatpush1.msra.mxu0 %v85
  %129 = vmatprep.subr.mxu0 0.0
  %130 = vmatpush1.msra.mxu0 %v86
  %131 = vmatprep.subr.mxu0 0.0
  %132 = vmatpush1.msra.mxu0 %v87
  %133 = vmatprep.subr.mxu0 0.0
  %134 = vmatpush1.msra.mxu0 %v88
  %135 = vmatprep.subr.mxu0 0.0
  %136 = vmatpush1.msra.mxu0 %v89
  %137 = vmatprep.subr.mxu0 0.0
  %138 = vmatpush1.msra.mxu0 %v90
  %139 = vmatprep.subr.mxu0 0.0
  %140 = vmatpush1.msra.mxu0 %v91
  %141 = vmatprep.subr.mxu0 0.0
  %142 = vmatpush1.msra.mxu0 %v92
  %143 = vmatprep.subr.mxu0 0.0
  %144 = vmatpush1.msra.mxu0 %v93
  %145 = vmatprep.subr.mxu0 0.0
  %146 = vmatpush1.msra.mxu0 %v94
  %147 = vmatprep.subr.mxu0 0.0
  %148 = vmatpush1.msra.mxu0 %v95
  %149 = vmatprep.subr.mxu0 0.0
  %150 = vmatpush1.msra.mxu0 %v96
  %151 = vmatprep.subr.mxu0 0.0
  %152 = vmatpush1.msra.mxu0 %v97
  %153 = vmatprep.subr.mxu0 0.0
  %154 = vmatpush1.msra.mxu0 %v98
  %155 = vmatprep.subr.mxu0 0.0
  %156 = vmatpush1.msra.mxu0 %v99
  %157 = vmatprep.subr.mxu0 0.0
  %158 = vmatpush1.msra.mxu0 %v100
  %159 = vmatprep.subr.mxu0 0.0
  %160 = vmatpush1.msra.mxu0 %v101
  %161 = vmatprep.subr.mxu0 0.0
  %162 = vmatpush1.msra.mxu0 %v102
  %163 = vmatprep.subr.mxu0 0.0
  %164 = vmatpush1.msra.mxu0 %v103
  %165 = vmatprep.subr.mxu0 0.0
  %166 = vmatpush1.msra.mxu0 %v104
  %167 = vmatprep.subr.mxu0 0.0
  %168 = vmatpush1.msra.mxu0 %v105
  %169 = vmatprep.subr.mxu0 0.0
  %170 = vmatpush1.msra.mxu0 %v106
  %171 = vmatprep.mubr.f32.mxu0 %v12
  %172 = vmatmul.mubr.f32.gmra.mrb[0].mxu0 %v11
  %v173 = vpop.f32.mrb[0].mxu0
  %v174 = vadd.f32 0.0, %v173
  %v175 = vpop.f32.mrb[0].mxu0
  %176 = vmatprep.mubr.f32.mxu0 %v14
  %177 = vmatmul.mubr.f32.gmra.mrb[0].mxu0 %v13
  %v178 = vpop.f32.mrb[0].mxu0
  %v179 = vadd.f32 0.0, %v178
  %v180 = vpop.f32.mrb[0].mxu0
  %181 = vmatprep.mubr.f32.mxu0 %v16
  %182 = vmatmul.mubr.f32.gmra.mrb[0].mxu0 %v15
  %v183 = vpop.f32.mrb[0].mxu0
  %v184 = vadd.f32 0.0, %v183
  %v185 = vpop.f32.mrb[0].mxu0
  %186 = vmatprep.mubr.f32.mxu0 %v18
  %187 = vmatmul.mubr.f32.gmra.mrb[0].mxu0 %v17
  %v188 = vpop.f32.mrb[0].mxu0
  %v189 = vadd.f32 0.0, %v188
  %v190 = vpop.f32.mrb[0].mxu0
  %191 = vmatprep.mubr.f32.mxu0 %v20
  %192 = vmatmul.mubr.f32.gmra.mrb[0].mxu0 %v19
  %v193 = vpop.f32.mrb[0].mxu0
  %v194 = vadd.f32 0.0, %v193
  %v195 = vpop.f32.mrb[0].mxu0
  %196 = vmatprep.mubr.f32.mxu0 %v22
  %197 = vmatmul.mubr.f32.gmra.mrb[0].mxu0 %v21
  %v198 = vpop.f32.mrb[0].mxu0
  %v199 = vadd.f32 0.0, %v198
  %v200 = vpop.f32.mrb[0].mxu0
  %201 = vmatprep.mubr.f32.mxu0 %v24
  %202 = vmatmul.mubr.f32.gmra.mrb[0].mxu0 %v23
  %v203 = vpop.f32.mrb[0].mxu0
  %v204 = vadd.f32 0.0, %v203
  %v205 = vpop.f32.mrb[0].mxu0
  %206 = vmatprep.mubr.f32.mxu0 %v26
  %207 = vmatmul.mubr.f32.gmra.mrb[0].mxu0 %v25
  %v208 = vpop.f32.mrb[0].mxu0
  %v209 = vadd.f32 0.0, %v208
  %v210 = vpop.f32.mrb[0].mxu0
  %211 = vmatprep.mubr.f32.mxu0 %v28
  %212 = vmatmul.mubr.f32.gmra.mrb[0].mxu0 %v27
  %v213 = vpop.f32.mrb[0].mxu0
  %v214 = vadd.f32 0.0, %v213
  %v215 = vpop.f32.mrb[0].mxu0
  %216 = vmatprep.mubr.f32.mxu0 %v30
  %217 = vmatmul.mubr.f32.gmra.mrb[0].mxu0 %v29
  %v218 = vpop.f32.mrb[0].mxu0
  %v219 = vadd.f32 0.0, %v218
  %v220 = vpop.f32.mrb[0].mxu0
  %221 = vmatprep.mubr.f32.mxu0 %v32
  %222 = vmatmul.mubr.f32.gmra.mrb[0].mxu0 %v31
  %v223 = vpop.f32.mrb[0].mxu0
  %v224 = vadd.f32 0.0, %v223
  %v225 = vpop.f32.mrb[0].mxu0
  %226 = vmatprep.mubr.f32.mxu0 %v34
  %227 = vmatmul.mubr.f32.gmra.mrb[0].mxu0 %v33
  %v228 = vpop.f32.mrb[0].mxu0
  %v229 = vadd.f32 0.0, %v228
  %v230 = vpop.f32.mrb[0].mxu0
  %231 = vmatprep.mubr.f32.mxu0 %v36
  %232 = vmatmul.mubr.f32.gmra.mrb[0].mxu0 %v35
  %v233 = vpop.f32.mrb[0].mxu0
  %v234 = vadd.f32 0.0, %v233
  %v235 = vpop.f32.mrb[0].mxu0
  %236 = vmatprep.mubr.f32.mxu0 %v38
  %237 = vmatmul.mubr.f32.gmra.mrb[0].mxu0 %v37
  %v238 = vpop.f32.mrb[0].mxu0
  %v239 = vadd.f32 0.0, %v238
  %v240 = vpop.f32.mrb[0].mxu0
  %241 = vmatprep.mubr.f32.mxu0 %v40
  %242 = vmatmul.mubr.f32.gmra.mrb[0].mxu0 %v39
  %v243 = vpop.f32.mrb[0].mxu0
  %v244 = vadd.f32 0.0, %v243
  %v245 = vpop.f32.mrb[0].mxu0
  %246 = vmatprep.mubr.f32.mxu0 %v42
  %247 = vmatmul.mubr.f32.gmra.mrb[0].mxu0 %v41
  %v248 = vpop.f32.mrb[0].mxu0
  %v249 = vadd.f32 0.0, %v248
  %v250 = vpop.f32.mrb[0].mxu0
  %251 = vmatprep.mubr.f32.mxu0 %v44
  %252 = vmatmul.mubr.f32.gmra.mrb[0].mxu0 %v43
  %v253 = vpop.f32.mrb[0].mxu0
  %v254 = vadd.f32 0.0, %v253
  %v255 = vpop.f32.mrb[0].mxu0
  %256 = vmatprep.mubr.f32.mxu0 %v46
  %257 = vmatmul.mubr.f32.gmra.mrb[0].mxu0 %v45
  %v258 = vpop.f32.mrb[0].mxu0
  %v259 = vadd.f32 0.0, %v258
  %v260 = vpop.f32.mrb[0].mxu0
  %261 = vmatprep.mubr.f32.mxu0 %v48
  %262 = vmatmul.mubr.f32.gmra.mrb[0].mxu0 %v47
  %v263 = vpop.f32.mrb[0].mxu0
  %v264 = vadd.f32 0.0, %v263
  %v265 = vpop.f32.mrb[0].mxu0
  %266 = vmatprep.mubr.f32.mxu0 %v50
  %267 = vmatmul.mubr.f32.gmra.mrb[0].mxu0 %v49
  %v268 = vpop.f32.mrb[0].mxu0
  %v269 = vadd.f32 0.0, %v268
  %v270 = vpop.f32.mrb[0].mxu0
  %271 = vmatprep.mubr.f32.mxu0 %v52
  %272 = vmatmul.mubr.f32.gmra.mrb[0].mxu0 %v51
  %v273 = vpop.f32.mrb[0].mxu0
  %v274 = vadd.f32 0.0, %v273
  %v275 = vpop.f32.mrb[0].mxu0
  %276 = vmatprep.mubr.f32.mxu0 %v54
  %277 = vmatmul.mubr.f32.gmra.mrb[0].mxu0 %v53
  %v278 = vpop.f32.mrb[0].mxu0
  %v279 = vadd.f32 0.0, %v278
  %v280 = vpop.f32.mrb[0].mxu0
  %281 = vmatprep.mubr.f32.mxu0 %v56
  %282 = vmatmul.mubr.f32.gmra.mrb[0].mxu0 %v55
  %v283 = vpop.f32.mrb[0].mxu0
  %v284 = vadd.f32 0.0, %v283
  %v285 = vpop.f32.mrb[0].mxu0
  %286 = vmatprep.mubr.f32.mxu0 %v58
  %287 = vmatmul.mubr.f32.gmra.mrb[0].mxu0 %v57
  %v288 = vpop.f32.mrb[0].mxu0
  %v289 = vadd.f32 0.0, %v288
  %v290 = vpop.f32.mrb[0].mxu0
  %291 = vmatprep.mubr.f32.mxu0 %v60
  %292 = vmatmul.mubr.f32.gmra.mrb[0].mxu0 %v59
  %v293 = vpop.f32.mrb[0].mxu0
  %v294 = vadd.f32 0.0, %v293
  %v295 = vpop.f32.mrb[0].mxu0
  %296 = vmatprep.mubr.f32.mxu0 %v62
  %297 = vmatmul.mubr.f32.gmra.mrb[0].mxu0 %v61
  %v298 = vpop.f32.mrb[0].mxu0
  %v299 = vadd.f32 0.0, %v298
  %v300 = vpop.f32.mrb[0].mxu0
  %301 = vmatprep.mubr.f32.mxu0 %v64
  %302 = vmatmul.mubr.f32.gmra.mrb[0].mxu0 %v63
  %v303 = vpop.f32.mrb[0].mxu0
  %v304 = vadd.f32 0.0, %v303
  %v305 = vpop.f32.mrb[0].mxu0
  %306 = vmatprep.mubr.f32.mxu0 %v66
  %307 = vmatmul.mubr.f32.gmra.mrb[0].mxu0 %v65
  %v308 = vpop.f32.mrb[0].mxu0
  %v309 = vadd.f32 0.0, %v308
  %v310 = vpop.f32.mrb[0].mxu0
  %311 = vmatprep.mubr.f32.mxu0 %v68
  %312 = vmatmul.mubr.f32.gmra.mrb[0].mxu0 %v67
  %v313 = vpop.f32.mrb[0].mxu0
  %v314 = vadd.f32 0.0, %v313
  %v315 = vpop.f32.mrb[0].mxu0
  %316 = vmatprep.mubr.f32.mxu0 %v70
  %317 = vmatmul.mubr.f32.gmra.mrb[0].mxu0 %v69
  %v318 = vpop.f32.mrb[0].mxu0
  %v319 = vadd.f32 0.0, %v318
  %v320 = vpop.f32.mrb[0].mxu0
  %321 = vmatprep.mubr.f32.mxu0 %v72
  %322 = vmatmul.mubr.f32.gmra.mrb[0].mxu0 %v71
  %v323 = vpop.f32.mrb[0].mxu0
  %v324 = vadd.f32 0.0, %v323
  %v325 = vpop.f32.mrb[0].mxu0
  %326 = vmatprep.mubr.f32.mxu0 %v74
  %327 = vmatmul.mubr.f32.gmra.mrb[0].mxu0 %v73
  %v328 = vpop.f32.mrb[0].mxu0
  %v329 = vadd.f32 0.0, %v328
  %v330 = vpop.f32.mrb[0].mxu0
  %331 = vdwg.mxu0
  %v332 = vmul.f32 %v174, %v174
  %v333 = vmul.f32 %v179, %v179
  %v334 = vmul.f32 %v184, %v184
  %v335 = vmul.f32 %v189, %v189
  %v336 = vmul.f32 %v194, %v194
  %v337 = vmul.f32 %v199, %v199
  %v338 = vmul.f32 %v204, %v204
  %v339 = vmul.f32 %v209, %v209
  %v340 = vmul.f32 %v214, %v214
  %v341 = vmul.f32 %v219, %v219
  %v342 = vmul.f32 %v224, %v224
  %v343 = vmul.f32 %v229, %v229
  %v344 = vmul.f32 %v234, %v234
  %v345 = vmul.f32 %v239, %v239
  %v346 = vmul.f32 %v244, %v244
  %v347 = vmul.f32 %v249, %v249
  %v348 = vmul.f32 %v254, %v254
  %v349 = vmul.f32 %v259, %v259
  %v350 = vmul.f32 %v264, %v264
  %v351 = vmul.f32 %v269, %v269
  %v352 = vmul.f32 %v274, %v274
  %v353 = vmul.f32 %v279, %v279
  %v354 = vmul.f32 %v284, %v284
  %v355 = vmul.f32 %v289, %v289
  %v356 = vmul.f32 %v294, %v294
  %v357 = vmul.f32 %v299, %v299
  %v358 = vmul.f32 %v304, %v304
  %v359 = vmul.f32 %v309, %v309
  %v360 = vmul.f32 %v314, %v314
  %v361 = vmul.f32 %v319, %v319
  %v362 = vmul.f32 %v324, %v324
  %v363 = vmul.f32 %v329, %v329
  %364 = vadd.xlane.f32.xlu0 %v332
  %v365 = vpop.xlane.xlu0 %364
  %366 = vadd.xlane.f32.xlu0 %v333
  %v367 = vpop.xlane.xlu0 %366
  %368 = vadd.xlane.f32.xlu0 %v334
  %v369 = vpop.xlane.xlu0 %368
  %370 = vadd.xlane.f32.xlu0 %v335
  %v371 = vpop.xlane.xlu0 %370
  %372 = vadd.xlane.f32.xlu0 %v336
  %v373 = vpop.xlane.xlu0 %372
  %374 = vadd.xlane.f32.xlu0 %v337
  %v375 = vpop.xlane.xlu0 %374
  %376 = vadd.xlane.f32.xlu0 %v338
  %v377 = vpop.xlane.xlu0 %376
  %378 = vadd.xlane.f32.xlu0 %v339
  %v379 = vpop.xlane.xlu0 %378
  %380 = vadd.xlane.f32.xlu0 %v340
  %v381 = vpop.xlane.xlu0 %380
  %382 = vadd.xlane.f32.xlu0 %v341
  %v383 = vpop.xlane.xlu0 %382
  %384 = vadd.xlane.f32.xlu0 %v342
  %v385 = vpop.xlane.xlu0 %384
  %386 = vadd.xlane.f32.xlu0 %v343
  %v387 = vpop.xlane.xlu0 %386
  %388 = vadd.xlane.f32.xlu0 %v344
  %v389 = vpop.xlane.xlu0 %388
  %390 = vadd.xlane.f32.xlu0 %v345
  %v391 = vpop.xlane.xlu0 %390
  %392 = vadd.xlane.f32.xlu0 %v346
  %v393 = vpop.xlane.xlu0 %392
  %394 = vadd.xlane.f32.xlu0 %v347
  %v395 = vpop.xlane.xlu0 %394
  %396 = vadd.xlane.f32.xlu0 %v348
  %v397 = vpop.xlane.xlu0 %396
  %398 = vadd.xlane.f32.xlu0 %v349
  %v399 = vpop.xlane.xlu0 %398
  %400 = vadd.xlane.f32.xlu0 %v350
  %v401 = vpop.xlane.xlu0 %400
  %402 = vadd.xlane.f32.xlu0 %v351
  %v403 = vpop.xlane.xlu0 %402
  %404 = vadd.xlane.f32.xlu0 %v352
  %v405 = vpop.xlane.xlu0 %404
  %406 = vadd.xlane.f32.xlu0 %v353
  %v407 = vpop.xlane.xlu0 %406
  %408 = vadd.xlane.f32.xlu0 %v354
  %v409 = vpop.xlane.xlu0 %408
  %410 = vadd.xlane.f32.xlu0 %v355
  %v411 = vpop.xlane.xlu0 %410
  %412 = vadd.xlane.f32.xlu0 %v356
  %v413 = vpop.xlane.xlu0 %412
  %414 = vadd.xlane.f32.xlu0 %v357
  %v415 = vpop.xlane.xlu0 %414
  %416 = vadd.xlane.f32.xlu0 %v358
  %v417 = vpop.xlane.xlu0 %416
  %418 = vadd.xlane.f32.xlu0 %v359
  %v419 = vpop.xlane.xlu0 %418
  %420 = vadd.xlane.f32.xlu0 %v360
  %v421 = vpop.xlane.xlu0 %420
  %422 = vadd.xlane.f32.xlu0 %v361
  %v423 = vpop.xlane.xlu0 %422
  %424 = vadd.xlane.f32.xlu0 %v362
  %v425 = vpop.xlane.xlu0 %424
  %426 = vadd.xlane.f32.xlu0 %v363
  %v427 = vpop.xlane.xlu0 %426
  %v428 = vmax.f32 %v365, 1e-24
  %v429 = vmax.f32 %v367, 1e-24
  %v430 = vmax.f32 %v369, 1e-24
  %v431 = vmax.f32 %v371, 1e-24
  %v432 = vmax.f32 %v373, 1e-24
  %v433 = vmax.f32 %v375, 1e-24
  %v434 = vmax.f32 %v377, 1e-24
  %v435 = vmax.f32 %v379, 1e-24
  %v436 = vmax.f32 %v381, 1e-24
  %v437 = vmax.f32 %v383, 1e-24
  %v438 = vmax.f32 %v385, 1e-24
  %v439 = vmax.f32 %v387, 1e-24
  %v440 = vmax.f32 %v389, 1e-24
  %v441 = vmax.f32 %v391, 1e-24
  %v442 = vmax.f32 %v393, 1e-24
  %v443 = vmax.f32 %v395, 1e-24
  %v444 = vmax.f32 %v397, 1e-24
  %v445 = vmax.f32 %v399, 1e-24
  %v446 = vmax.f32 %v401, 1e-24
  %v447 = vmax.f32 %v403, 1e-24
  %v448 = vmax.f32 %v405, 1e-24
  %v449 = vmax.f32 %v407, 1e-24
  %v450 = vmax.f32 %v409, 1e-24
  %v451 = vmax.f32 %v411, 1e-24
  %v452 = vmax.f32 %v413, 1e-24
  %v453 = vmax.f32 %v415, 1e-24
  %v454 = vmax.f32 %v417, 1e-24
  %v455 = vmax.f32 %v419, 1e-24
  %v456 = vmax.f32 %v421, 1e-24
  %v457 = vmax.f32 %v423, 1e-24
  %v458 = vmax.f32 %v425, 1e-24
  %v459 = vmax.f32 %v427, 1e-24
  %v460 = vrsqrt.pop %v428
  %v461 = vrsqrt.pop %v429
  %v462 = vrsqrt.pop %v430
  %v463 = vrsqrt.pop %v431
  %v464 = vrsqrt.pop %v432
  %v465 = vrsqrt.pop %v433
  %v466 = vrsqrt.pop %v434
  %v467 = vrsqrt.pop %v435
  %v468 = vrsqrt.pop %v436
  %v469 = vrsqrt.pop %v437
  %v470 = vrsqrt.pop %v438
  %v471 = vrsqrt.pop %v439
  %v472 = vrsqrt.pop %v440
  %v473 = vrsqrt.pop %v441
  %v474 = vrsqrt.pop %v442
  %v475 = vrsqrt.pop %v443
  %v476 = vrsqrt.pop %v444
  %v477 = vrsqrt.pop %v445
  %v478 = vrsqrt.pop %v446
  %v479 = vrsqrt.pop %v447
  %v480 = vrsqrt.pop %v448
  %v481 = vrsqrt.pop %v449
  %v482 = vrsqrt.pop %v450
  %v483 = vrsqrt.pop %v451
  %v484 = vrsqrt.pop %v452
  %v485 = vrsqrt.pop %v453
  %v486 = vrsqrt.pop %v454
  %v487 = vrsqrt.pop %v455
  %v488 = vrsqrt.pop %v456
  %v489 = vrsqrt.pop %v457
  %v490 = vrsqrt.pop %v458
  %v491 = vrsqrt.pop %v459
  %v492 = vmul.f32 %v174, %v460
  %v493 = vmul.f32 %v179, %v461
  %v494 = vmul.f32 %v184, %v462
  %v495 = vmul.f32 %v189, %v463
  %v496 = vmul.f32 %v194, %v464
  %v497 = vmul.f32 %v199, %v465
  %v498 = vmul.f32 %v204, %v466
  %v499 = vmul.f32 %v209, %v467
  %v500 = vmul.f32 %v214, %v468
  %v501 = vmul.f32 %v219, %v469
  %v502 = vmul.f32 %v224, %v470
  %v503 = vmul.f32 %v229, %v471
  %v504 = vmul.f32 %v234, %v472
  %v505 = vmul.f32 %v239, %v473
  %v506 = vmul.f32 %v244, %v474
  %v507 = vmul.f32 %v249, %v475
  %v508 = vmul.f32 %v254, %v476
  %v509 = vmul.f32 %v259, %v477
  %v510 = vmul.f32 %v264, %v478
  %v511 = vmul.f32 %v269, %v479
  %v512 = vmul.f32 %v274, %v480
  %v513 = vmul.f32 %v279, %v481
  %v514 = vmul.f32 %v284, %v482
  %v515 = vmul.f32 %v289, %v483
  %v516 = vmul.f32 %v294, %v484
  %v517 = vmul.f32 %v299, %v485
  %v518 = vmul.f32 %v304, %v486
  %v519 = vmul.f32 %v309, %v487
  %v520 = vmul.f32 %v314, %v488
  %v521 = vmul.f32 %v319, %v489
  %v522 = vmul.f32 %v324, %v490
  %v523 = vmul.f32 %v329, %v491
  %524 = vst [vmem:[%s2] sm:$0xff] %v492
  %525 = vst [vmem:[%s2 + $0x8] sm:$0xff] %v493
  %526 = vst [vmem:[%s2 + $0x10] sm:$0xff] %v494
  %527 = vst [vmem:[%s2 + $0x18] sm:$0xff] %v495
  %528 = vst [vmem:[%s2 + $0x20] sm:$0xff] %v496
  %529 = vst [vmem:[%s2 + $0x28] sm:$0xff] %v497
  %530 = vst [vmem:[%s2 + $0x30] sm:$0xff] %v498
  %531 = vst [vmem:[%s2 + $0x38] sm:$0xff] %v499
  %532 = vst [vmem:[%s2 + $0x40] sm:$0xff] %v500
  %533 = vst [vmem:[%s2 + $0x48] sm:$0xff] %v501
  %534 = vst [vmem:[%s2 + $0x50] sm:$0xff] %v502
  %535 = vst [vmem:[%s2 + $0x58] sm:$0xff] %v503
  %536 = vst [vmem:[%s2 + $0x60] sm:$0xff] %v504
  %537 = vst [vmem:[%s2 + $0x68] sm:$0xff] %v505
  %538 = vst [vmem:[%s2 + $0x70] sm:$0xff] %v506
  %539 = vst [vmem:[%s2 + $0x78] sm:$0xff] %v507
  %540 = vst [vmem:[%s2 + $0x80] sm:$0xff] %v508
  %541 = vst [vmem:[%s2 + $0x88] sm:$0xff] %v509
  %542 = vst [vmem:[%s2 + $0x90] sm:$0xff] %v510
  %543 = vst [vmem:[%s2 + $0x98] sm:$0xff] %v511
  %544 = vst [vmem:[%s2 + $0xa0] sm:$0xff] %v512
  %545 = vst [vmem:[%s2 + $0xa8] sm:$0xff] %v513
  %546 = vst [vmem:[%s2 + $0xb0] sm:$0xff] %v514
  %547 = vst [vmem:[%s2 + $0xb8] sm:$0xff] %v515
  %548 = vst [vmem:[%s2 + $0xc0] sm:$0xff] %v516
  %549 = vst [vmem:[%s2 + $0xc8] sm:$0xff] %v517
  %550 = vst [vmem:[%s2 + $0xd0] sm:$0xff] %v518
  %551 = vst [vmem:[%s2 + $0xd8] sm:$0xff] %v519
  %552 = vst [vmem:[%s2 + $0xe0] sm:$0xff] %v520
  %553 = vst [vmem:[%s2 + $0xe8] sm:$0xff] %v521
  %554 = vst [vmem:[%s2 + $0xf0] sm:$0xff] %v522
  %555 = vst [vmem:[%s2 + $0xf8] sm:$0xff] %v523
  // Predicated region
  $region10: #{global_item_conv.1} parent=0 // pred_check
    _
  $region11: #{global_item_conv.1} parent=0 // pred_check_branch
    %557 = sbr.rel (0) target = $region13
  $region12: #{global_item_conv.1} parent=0 // pred_region
    _
  $region13: #{global_item_conv.1} parent=0 // pred_fallthru
    _
  // Predicated region
  $region14: #{global_item_conv.1} parent=0 // pred_check
    _
  $region15: #{global_item_conv.1} parent=0 // pred_check_branch
    %559 = sbr.rel (0) target = $region17
  $region16: #{global_item_conv.1} parent=0 // pred_region
    _
  $region17: #{global_item_conv.1} parent=0 // pred_fallthru
    _

</llo_original>
